<compile_context>
chip_gen: v7x
topology: tpu7x:2x2x1
jax: 0.10.0
libtpu: 0.0.40
codegen_flags: <defaults>
</compile_context>

<pallas_src>
import functools
import math

import jax
import jax.numpy as jnp
from jax.experimental import pallas as pl
from jax.experimental.pallas import tpu as pltpu


HEAD_HALF = 64    # lane offset of log_sigma inside the fused head slab
HEAD_PAD = 128    # lane-dense output width


def _gelu_exact(x):
    # exact (erf-based) GELU — matches torch.nn.functional.gelu default.
    # (A tanh-approx variant would offload to the EUP — worthwhile on v5e —
    #  but is numerically different, so it is not enabled here.)
    return 0.5 * x * (1.0 + jax.lax.erf(x * (1.0 / math.sqrt(2.0))))


def _round_up(x, m):
    return ((x + m - 1) // m) * m


def _cdiv(a, b):
    return -(-a // b)


@functools.lru_cache(maxsize=1)
def _single_buffer_supported():
    """Probe once whether pipeline_mode=pl.Buffered(1) lowers/runs on this backend."""
    def _probe_kernel(x_ref, o_ref):
        o_ref[...] = x_ref[...] + 1.0

    try:
        fn = pl.pallas_call(
            _probe_kernel,
            out_shape=jax.ShapeDtypeStruct((8, 128), jnp.float32),
            grid=(2,),
            in_specs=[pl.BlockSpec((8, 128), lambda i: (0, 0),
                                   pipeline_mode=pl.Buffered(1))],
            out_specs=pl.BlockSpec((8, 128), lambda i: (0, 0)),
        )
        jax.block_until_ready(jax.jit(fn)(jnp.zeros((8, 128), jnp.float32)))
        return True
    except Exception:
        return False


def _weight_spec(shape):
    """BlockSpec for a grid-invariant (VMEM-resident) operand."""
    fix_map = lambda i: (0, 0)
    if _single_buffer_supported():
        # Grid-invariant -> double-buffering is pure VMEM waste; single-buffer.
        return pl.BlockSpec(shape, fix_map, pipeline_mode=pl.Buffered(1))
    return pl.BlockSpec(shape, fix_map)


def _batch_tiling(B):
    """Pick (row tile TB, number of grid steps)."""
    B16 = _round_up(max(B, 1), 16)               # bf16 sublane tile is (16, 128)
    if B16 <= 256:
        return B16, 1                            # one fat step; <=15 padded rows
    # >= 2 balanced steps (v7x megacore), at most ~1024 rows per step.
    n_steps = max(2, _cdiv(B16, 1024))
    tb = _round_up(_cdiv(B16, n_steps), 16)
    return tb, n_steps


def gaussian_policy_kernel(
    o_ref,                       # (TB, o_dim)  f32 — cast to bf16 in-kernel
    w1_ref,                      # (o_dim, H)   bf16
    w2_ref,                      # (H, H)       bf16
    w3_ref,                      # (H, H)       bf16
    wh_ref,                      # (H, 128)     bf16  (fused mu / log_sigma heads)
    b_ref,                       # (8, H)       f32   rows 0..3 = b1, b2, b3, bh
    out_ref,                     # (TB, 128)    lane-dense output slab
):
    x = o_ref[...].astype(jnp.bfloat16)          # in-kernel cast (free VPU slot)

    h = jnp.dot(x, w1_ref[...], preferred_element_type=jnp.float32) + b_ref[0:1, :]
    h = _gelu_exact(h).astype(jnp.bfloat16)

    h = jnp.dot(h, w2_ref[...], preferred_element_type=jnp.float32) + b_ref[1:2, :]
    h = _gelu_exact(h).astype(jnp.bfloat16)

    h = jnp.dot(h, w3_ref[...], preferred_element_type=jnp.float32) + b_ref[2:3, :]
    h = _gelu_exact(h).astype(jnp.bfloat16)

    # Fused head projection: one MXU push, one lane-dense store.
    head = (jnp.dot(h, wh_ref[...], preferred_element_type=jnp.float32)
            + b_ref[3:4, :HEAD_PAD])

    # clamp only the log_sigma half of the slab (lanes >= HEAD_HALF)
    col = jax.lax.broadcasted_iota(jnp.int32, head.shape, dimension=1)
    clipped = jnp.clip(head, -20.0, 2.0)
    out_ref[...] = jnp.where(col >= HEAD_HALF, clipped, head).astype(out_ref.dtype)


def pack_params(params):
    """Cast weights to bf16, pad hidden width to a multiple of 128, fuse the two
    head projections into one (H, 128) slab, and pack all biases into one (8, H)
    f32 operand. Zero padding is numerically inert (gelu(0)=0)."""
    o_dim, h_dim = params["w1"].shape
    a_dim = params["w4"].shape[1]
    assert a_dim <= HEAD_HALF, "a_dim must fit in half the padded head slab"

    H = _round_up(h_dim, 128)                    # lane-dense hidden width

    def pad_w(w, rows, cols):
        out = jnp.zeros((rows, cols), jnp.float32)
        return out.at[: w.shape[0], : w.shape[1]].set(w)

    w1 = pad_w(params["w1"], o_dim, H)
    w2 = pad_w(params["w2"], H, H)
    w3 = pad_w(params["w3"], H, H)

    wh = jnp.zeros((H, HEAD_PAD), jnp.float32)
    wh = wh.at[:h_dim, :a_dim].set(params["w4"])
    wh = wh.at[:h_dim, HEAD_HALF:HEAD_HALF + a_dim].set(params["w5"])

    bias = jnp.zeros((8, H), jnp.float32)
    bias = bias.at[0, :h_dim].set(params["b1"][0])
    bias = bias.at[1, :h_dim].set(params["b2"][0])
    bias = bias.at[2, :h_dim].set(params["b3"][0])
    bias = bias.at[3, :a_dim].set(params["b4"][0])
    bias = bias.at[3, HEAD_HALF:HEAD_HALF + a_dim].set(params["b5"][0])

    return {
        "w1": w1.astype(jnp.bfloat16),
        "w2": w2.astype(jnp.bfloat16),
        "w3": w3.astype(jnp.bfloat16),
        "wh": wh.astype(jnp.bfloat16),
        "bias": bias,                            # f32
    }


def _vmem_limit_bytes(TB, o_dim, H, single_buffered, out_itemsize):
    w_bufs = 1 if single_buffered else 2
    w_bytes = 2 * (o_dim * H + 2 * H * H + H * HEAD_PAD)        # bf16 weights
    b_bytes = 4 * 8 * H                                         # f32 bias slab
    io_bytes = 2 * TB * o_dim * 4 + 2 * TB * HEAD_PAD * out_itemsize
    est = w_bufs * (w_bytes + b_bytes) + io_bytes
    return int(min(64 * 1024 * 1024, max(2 * est, 16 * 1024 * 1024)))


@functools.partial(jax.jit, static_argnames=("a_dim", "out_dtype"))
def gaussian_policy_forward(o, packed, *, a_dim, out_dtype=jnp.float32):
    """o: (B, o_dim) f32. packed: output of pack_params. Returns (mu, log_sigma) f32."""
    B, o_dim = o.shape
    w1, w2, w3, wh, bias = (packed["w1"], packed["w2"], packed["w3"],
                            packed["wh"], packed["bias"])
    H = w2.shape[0]

    TB, n_steps = _batch_tiling(B)
    B_pad = TB * n_steps
    o_p = jnp.pad(o, ((0, B_pad - B), (0, 0))) if B_pad != B else o
    # NOTE: o stays f32 here; the bf16 cast happens inside the kernel.

    out_itemsize = jnp.dtype(out_dtype).itemsize
    single_buffered = _single_buffer_supported()

    flops = 2 * B_pad * (o_dim * H + 2 * H * H + H * HEAD_PAD)
    bytes_accessed = (B_pad * o_dim * 4
                      + 2 * (w1.size + w2.size + w3.size + wh.size)
                      + 4 * bias.size
                      + B_pad * HEAD_PAD * out_itemsize)
    cost = pl.CostEstimate(flops=flops,
                           transcendentals=3 * B_pad * H,
                           bytes_accessed=bytes_accessed)

    row_map = lambda i: (i, 0)

    out = pl.pallas_call(
        gaussian_policy_kernel,
        out_shape=jax.ShapeDtypeStruct((B_pad, HEAD_PAD), out_dtype),
        grid=(n_steps,),
        in_specs=[
            pl.BlockSpec((TB, o_dim), row_map),
            _weight_spec(w1.shape),
            _weight_spec(w2.shape),
            _weight_spec(w3.shape),
            _weight_spec(wh.shape),
            _weight_spec(bias.shape),
        ],
        out_specs=pl.BlockSpec((TB, HEAD_PAD), row_map),
        compiler_params=pltpu.CompilerParams(
            dimension_semantics=("parallel",),   # v7x: shard the batch over both TCs
            vmem_limit_bytes=_vmem_limit_bytes(TB, o_dim, H,
                                               single_buffered, out_itemsize),
        ),
        cost_estimate=cost,
    )(o_p, w1, w2, w3, wh, bias)

    mu = out[:B, :a_dim].astype(jnp.float32)
    log_sigma = out[:B, HEAD_HALF:HEAD_HALF + a_dim].astype(jnp.float32)
    return mu, log_sigma


def init_params(key, o_dim, a_dim, h_dim):
    """Deterministic xavier-uniform weights (as in weights_init_), zero biases."""
    dims = [(o_dim, h_dim), (h_dim, h_dim), (h_dim, h_dim), (h_dim, a_dim), (h_dim, a_dim)]
    params = {}
    for i, (fan_in, fan_out) in enumerate(dims, start=1):
        key, sub = jax.random.split(key)
        bound = math.sqrt(6.0 / (fan_in + fan_out))
        params[f"w{i}"] = jax.random.uniform(
            sub, (fan_in, fan_out), jnp.float32, minval=-bound, maxval=bound
        )
        params[f"b{i}"] = jnp.zeros((1, fan_out), jnp.float32)
    return params


def _dot(a, b):
    return jnp.dot(a, b, precision=jax.lax.Precision.HIGHEST,
                   preferred_element_type=jnp.float32)


def reference_forward_f32(o, params):
    """Pure f32 reference matching the PyTorch module semantics."""
    h = _gelu_exact(_dot(o, params["w1"]) + params["b1"])
    h = _gelu_exact(_dot(h, params["w2"]) + params["b2"])
    h = _gelu_exact(_dot(h, params["w3"]) + params["b3"])
    mu = _dot(h, params["w4"]) + params["b4"]
    log_sigma = jnp.clip(_dot(h, params["w5"]) + params["b5"], -20.0, 2.0)
    return mu, log_sigma


def reference_forward_bf16path(o, params):
    """Reference following the kernel's bf16-operand / f32-accumulate discipline."""
    q = lambda x: x.astype(jnp.bfloat16).astype(jnp.float32)
    h = _gelu_exact(_dot(q(o), q(params["w1"])) + params["b1"])
    h = _gelu_exact(_dot(q(h), q(params["w2"])) + params["b2"])
    h = _gelu_exact(_dot(q(h), q(params["w3"])) + params["b3"])
    hq = q(h)
    mu = _dot(hq, q(params["w4"])) + params["b4"]
    log_sigma = jnp.clip(_dot(hq, q(params["w5"])) + params["b5"], -20.0, 2.0)
    return mu, log_sigma


if __name__ == "__main__":
    o_dim, a_dim, h_dim = 16, 8, 32

    key = jax.random.PRNGKey(0)
    key, pkey, okey1, okey2 = jax.random.split(key, 4)
    params = init_params(pkey, o_dim, a_dim, h_dim)
    packed = pack_params(params)

    # Warm the single-buffer capability probe outside any jit trace.
    _single_buffer_supported()

    # Small batch: single grid step (TB=16).
    o_small = jax.random.normal(okey1, (8, o_dim), jnp.float32)
    mu1, ls1 = gaussian_policy_forward(o_small, packed, a_dim=a_dim)
    jax.block_until_ready((mu1, ls1))

    # Larger, non-multiple batch: exercises the balanced >=2-step batch grid
    # (B=600 -> TB=304, 2 grid steps, only 8 padded rows).
    o_large = jax.random.normal(okey2, (600, o_dim), jnp.float32)
    mu2, ls2 = gaussian_policy_forward(o_large, packed, a_dim=a_dim)
    jax.block_until_ready((mu2, ls2))

    for o, mu, ls in ((o_small, mu1, ls1), (o_large, mu2, ls2)):
        B = o.shape[0]
        assert mu.shape == (B, a_dim) and ls.shape == (B, a_dim)

        mu_b, ls_b = reference_forward_bf16path(o, params)
        assert jnp.allclose(mu, mu_b, atol=5e-3, rtol=5e-3)
        assert jnp.allclose(ls, ls_b, atol=5e-3, rtol=5e-3)

        # Sanity vs the exact f32 module semantics (bf16 operands -> looser tol).
        mu_f, ls_f = reference_forward_f32(o, params)
        assert jnp.allclose(mu, mu_f, atol=5e-2, rtol=5e-2)
        assert jnp.allclose(ls, ls_f, atol=5e-2, rtol=5e-2)

    # Optional bf16 output slab (halves the dominant HBM writeback on v5e/v6e).
    mu3, ls3 = gaussian_policy_forward(o_small, packed, a_dim=a_dim,
                                       out_dtype=jnp.bfloat16)
    jax.block_until_ready((mu3, ls3))
    mu_f, ls_f = reference_forward_f32(o_small, params)
    assert jnp.allclose(mu3, mu_f, atol=5e-2, rtol=5e-2)
    assert jnp.allclose(ls3, ls_f, atol=5e-2, rtol=5e-2)

    print("KERNEL_OK")
</pallas_src>

<mosaic_0001>
module attributes {stable_mosaic.version = 11 : i64} {
  func.func @_probe_kernel(%arg0: i32, %arg1: memref<8x128xf32, #tpu.memory_space<vmem>>, %arg2: memref<8x128xf32, #tpu.memory_space<vmem>>) attributes {dimension_semantics = [#tpu.dimension_semantics<arbitrary>], iteration_bounds = array<i64: 2>, scalar_prefetch = 0 : i64, scratch_operands = 0 : i64, tpu.core_type = #tpu.core_type<tc>, window_params = [{pipeline_mode = #tpu.pipeline_mode<synchronous>, transform_indices = @transform_0, window_bounds = array<i64: 8, 128>}, {pipeline_mode = #tpu.pipeline_mode<synchronous>, transform_indices = @transform_1, window_bounds = array<i64: 8, 128>}]} {
    %c0 = arith.constant 0 : index
    %c0_0 = arith.constant 0 : index
    %0 = vector.load %arg1[%c0, %c0_0] : memref<8x128xf32, #tpu.memory_space<vmem>>, vector<8x128xf32>
    %cst = arith.constant 1.000000e+00 : f32
    %1 = vector.broadcast %cst : f32 to vector<8x128xf32>
    %2 = arith.addf %0, %1 : vector<8x128xf32>
    %c0_1 = arith.constant 0 : index
    %c0_2 = arith.constant 0 : index
    %3 = vector.load %arg2[%c0_1, %c0_2] : memref<8x128xf32, #tpu.memory_space<vmem>>, vector<8x128xf32>
    tpu.vector_store %arg2[%c0_1, %c0_2], %2 {strides = array<i32>} : memref<8x128xf32, #tpu.memory_space<vmem>>, vector<8x128xf32>,
    return
  }
  func.func @transform_0(%arg0: i32) -> (i32, i32) {
    %c0_i32 = arith.constant 0 : i32
    %c0_i32_0 = arith.constant 0 : i32
    %c0_i32_1 = arith.constant 0 : i32
    return %c0_i32, %c0_i32_0 : i32, i32
  }
  func.func @transform_1(%arg0: i32) -> (i32, i32) {
    %c0_i32 = arith.constant 0 : i32
    %c0_i32_0 = arith.constant 0 : i32
    %c0_i32_1 = arith.constant 0 : i32
    return %c0_i32, %c0_i32_0 : i32, i32
  }
}

module attributes {stable_mosaic.version = 11 : i64} {
  func.func @gaussian_policy_kernel(%arg0: i32, %arg1: memref<16x16xf32, #tpu.memory_space<vmem>>, %arg2: memref<16x128xbf16, #tpu.memory_space<vmem>>, %arg3: memref<128x128xbf16, #tpu.memory_space<vmem>>, %arg4: memref<128x128xbf16, #tpu.memory_space<vmem>>, %arg5: memref<128x128xbf16, #tpu.memory_space<vmem>>, %arg6: memref<8x128xf32, #tpu.memory_space<vmem>>, %arg7: memref<16x128xf32, #tpu.memory_space<vmem>>) attributes {dimension_semantics = [#tpu.dimension_semantics<parallel>], iteration_bounds = array<i64: 1>, scalar_prefetch = 0 : i64, scratch_operands = 0 : i64, tpu.core_type = #tpu.core_type<tc>, window_params = [{transform_indices = @transform_0, window_bounds = array<i64: 16, 16>}, {pipeline_mode = #tpu.pipeline_mode<synchronous>, transform_indices = @transform_1, window_bounds = array<i64: 16, 128>}, {pipeline_mode = #tpu.pipeline_mode<synchronous>, transform_indices = @transform_2, window_bounds = array<i64: 128, 128>}, {pipeline_mode = #tpu.pipeline_mode<synchronous>, transform_indices = @transform_3, window_bounds = array<i64: 128, 128>}, {pipeline_mode = #tpu.pipeline_mode<synchronous>, transform_indices = @transform_4, window_bounds = array<i64: 128, 128>}, {pipeline_mode = #tpu.pipeline_mode<synchronous>, transform_indices = @transform_5, window_bounds = array<i64: 8, 128>}, {transform_indices = @transform_6, window_bounds = array<i64: 16, 128>}]} {
    %c0 = arith.constant 0 : index
    %c0_0 = arith.constant 0 : index
    %0 = vector.load %arg1[%c0, %c0_0] : memref<16x16xf32, #tpu.memory_space<vmem>>, vector<16x16xf32>
    %1 = arith.truncf %0 : vector<16x16xf32> to vector<16x16xbf16>
    %c0_1 = arith.constant 0 : index
    %c0_2 = arith.constant 0 : index
    %2 = vector.load %arg2[%c0_1, %c0_2] : memref<16x128xbf16, #tpu.memory_space<vmem>>, vector<16x128xbf16>
    %cst = arith.constant dense<0.000000e+00> : vector<16x128xf32>
    %3 = tpu.matmul %1, %2, %cst {dimension_numbers = #tpu.dot_dimension_numbers<[1], [0], [0], [1], [0, 0, 1, 1], [], []>} : vector<16x16xbf16>, vector<16x128xbf16>, vector<16x128xf32> -> vector<16x128xf32>
    %c0_3 = arith.constant 0 : index
    %c0_4 = arith.constant 0 : index
    %4 = vector.load %arg6[%c0_3, %c0_4] : memref<8x128xf32, #tpu.memory_space<vmem>>, vector<1x128xf32>
    %5 = vector.broadcast %4 : vector<1x128xf32> to vector<16x128xf32>
    %6 = arith.addf %3, %5 : vector<16x128xf32>
    %cst_5 = arith.constant 5.000000e-01 : f32
    %7 = vector.broadcast %cst_5 : f32 to vector<16x128xf32>
    %8 = arith.mulf %7, %6 : vector<16x128xf32>
    %cst_6 = arith.constant 0.707106769 : f32
    %9 = vector.broadcast %cst_6 : f32 to vector<16x128xf32>
    %10 = arith.mulf %6, %9 : vector<16x128xf32>
    %11 = math.erf %10 : vector<16x128xf32>
    %cst_7 = arith.constant 1.000000e+00 : f32
    %12 = vector.broadcast %cst_7 : f32 to vector<16x128xf32>
    %13 = arith.addf %12, %11 : vector<16x128xf32>
    %14 = arith.mulf %8, %13 : vector<16x128xf32>
    %15 = arith.truncf %14 : vector<16x128xf32> to vector<16x128xbf16>
    %c0_8 = arith.constant 0 : index
    %c0_9 = arith.constant 0 : index
    %16 = vector.load %arg3[%c0_8, %c0_9] : memref<128x128xbf16, #tpu.memory_space<vmem>>, vector<128x128xbf16>
    %cst_10 = arith.constant dense<0.000000e+00> : vector<16x128xf32>
    %17 = tpu.matmul %15, %16, %cst_10 {dimension_numbers = #tpu.dot_dimension_numbers<[1], [0], [0], [1], [0, 0, 1, 1], [], []>} : vector<16x128xbf16>, vector<128x128xbf16>, vector<16x128xf32> -> vector<16x128xf32>
    %c1 = arith.constant 1 : index
    %c0_11 = arith.constant 0 : index
    %18 = vector.load %arg6[%c1, %c0_11] : memref<8x128xf32, #tpu.memory_space<vmem>>, vector<1x128xf32>
    %19 = vector.broadcast %18 : vector<1x128xf32> to vector<16x128xf32>
    %20 = arith.addf %17, %19 : vector<16x128xf32>
    %cst_12 = arith.constant 5.000000e-01 : f32
    %21 = vector.broadcast %cst_12 : f32 to vector<16x128xf32>
    %22 = arith.mulf %21, %20 : vector<16x128xf32>
    %cst_13 = arith.constant 0.707106769 : f32
    %23 = vector.broadcast %cst_13 : f32 to vector<16x128xf32>
    %24 = arith.mulf %20, %23 : vector<16x128xf32>
    %25 = math.erf %24 : vector<16x128xf32>
    %cst_14 = arith.constant 1.000000e+00 : f32
    %26 = vector.broadcast %cst_14 : f32 to vector<16x128xf32>
    %27 = arith.addf %26, %25 : vector<16x128xf32>
    %28 = arith.mulf %22, %27 : vector<16x128xf32>
    %29 = arith.truncf %28 : vector<16x128xf32> to vector<16x128xbf16>
    %c0_15 = arith.constant 0 : index
    %c0_16 = arith.constant 0 : index
    %30 = vector.load %arg4[%c0_15, %c0_16] : memref<128x128xbf16, #tpu.memory_space<vmem>>, vector<128x128xbf16>
    %cst_17 = arith.constant dense<0.000000e+00> : vector<16x128xf32>
    %31 = tpu.matmul %29, %30, %cst_17 {dimension_numbers = #tpu.dot_dimension_numbers<[1], [0], [0], [1], [0, 0, 1, 1], [], []>} : vector<16x128xbf16>, vector<128x128xbf16>, vector<16x128xf32> -> vector<16x128xf32>
    %c2 = arith.constant 2 : index
    %c0_18 = arith.constant 0 : index
    %32 = vector.load %arg6[%c2, %c0_18] : memref<8x128xf32, #tpu.memory_space<vmem>>, vector<1x128xf32>
    %33 = vector.broadcast %32 : vector<1x128xf32> to vector<16x128xf32>
    %34 = arith.addf %31, %33 : vector<16x128xf32>
    %cst_19 = arith.constant 5.000000e-01 : f32
    %35 = vector.broadcast %cst_19 : f32 to vector<16x128xf32>
    %36 = arith.mulf %35, %34 : vector<16x128xf32>
    %cst_20 = arith.constant 0.707106769 : f32
    %37 = vector.broadcast %cst_20 : f32 to vector<16x128xf32>
    %38 = arith.mulf %34, %37 : vector<16x128xf32>
    %39 = math.erf %38 : vector<16x128xf32>
    %cst_21 = arith.constant 1.000000e+00 : f32
    %40 = vector.broadcast %cst_21 : f32 to vector<16x128xf32>
    %41 = arith.addf %40, %39 : vector<16x128xf32>
    %42 = arith.mulf %36, %41 : vector<16x128xf32>
    %43 = arith.truncf %42 : vector<16x128xf32> to vector<16x128xbf16>
    %c0_22 = arith.constant 0 : index
    %c0_23 = arith.constant 0 : index
    %44 = vector.load %arg5[%c0_22, %c0_23] : memref<128x128xbf16, #tpu.memory_space<vmem>>, vector<128x128xbf16>
    %cst_24 = arith.constant dense<0.000000e+00> : vector<16x128xf32>
    %45 = tpu.matmul %43, %44, %cst_24 {dimension_numbers = #tpu.dot_dimension_numbers<[1], [0], [0], [1], [0, 0, 1, 1], [], []>} : vector<16x128xbf16>, vector<128x128xbf16>, vector<16x128xf32> -> vector<16x128xf32>
    %c3 = arith.constant 3 : index
    %c0_25 = arith.constant 0 : index
    %46 = vector.load %arg6[%c3, %c0_25] : memref<8x128xf32, #tpu.memory_space<vmem>>, vector<1x128xf32>
    %47 = vector.broadcast %46 : vector<1x128xf32> to vector<16x128xf32>
    %48 = arith.addf %45, %47 : vector<16x128xf32>
    %49 = tpu.iota {dimensions = array<i32: 1>} : vector<16x128xi32>
    %cst_26 = arith.constant -2.000000e+01 : f32
    %cst_27 = arith.constant 2.000000e+00 : f32
    %50 = vector.broadcast %cst_26 : f32 to vector<16x128xf32>
    %51 = arith.maximumf %50, %48 : vector<16x128xf32>
    %52 = vector.broadcast %cst_27 : f32 to vector<16x128xf32>
    %53 = arith.minimumf %52, %51 : vector<16x128xf32>
    %c64_i32 = arith.constant 64 : i32
    %54 = vector.broadcast %c64_i32 : i32 to vector<16x128xi32>
    %55 = arith.cmpi sge, %49, %54 : vector<16x128xi32>
    %56 = arith.select %55, %53, %48 : vector<16x128xi1>, vector<16x128xf32>
    %c0_28 = arith.constant 0 : index
    %c0_29 = arith.constant 0 : index
    %57 = vector.load %arg7[%c0_28, %c0_29] : memref<16x128xf32, #tpu.memory_space<vmem>>, vector<16x128xf32>
    tpu.vector_store %arg7[%c0_28, %c0_29], %56 {strides = array<i32>} : memref<16x128xf32, #tpu.memory_space<vmem>>, vector<16x128xf32>,
    return
  }
  func.func @transform_0(%arg0: i32) -> (i32, i32) {
    %c0_i32 = arith.constant 0 : i32
    %c0_i32_0 = arith.constant 0 : i32
    return %arg0, %c0_i32 : i32, i32
  }
  func.func @transform_1(%arg0: i32) -> (i32, i32) {
    %c0_i32 = arith.constant 0 : i32
    %c0_i32_0 = arith.constant 0 : i32
    %c0_i32_1 = arith.constant 0 : i32
    return %c0_i32, %c0_i32_0 : i32, i32
  }
  func.func @transform_2(%arg0: i32) -> (i32, i32) {
    %c0_i32 = arith.constant 0 : i32
    %c0_i32_0 = arith.constant 0 : i32
    %c0_i32_1 = arith.constant 0 : i32
    return %c0_i32, %c0_i32_0 : i32, i32
  }
  func.func @transform_3(%arg0: i32) -> (i32, i32) {
    %c0_i32 = arith.constant 0 : i32
    %c0_i32_0 = arith.constant 0 : i32
    %c0_i32_1 = arith.constant 0 : i32
    return %c0_i32, %c0_i32_0 : i32, i32
  }
  func.func @transform_4(%arg0: i32) -> (i32, i32) {
    %c0_i32 = arith.constant 0 : i32
    %c0_i32_0 = arith.constant 0 : i32
    %c0_i32_1 = arith.constant 0 : i32
    return %c0_i32, %c0_i32_0 : i32, i32
  }
  func.func @transform_5(%arg0: i32) -> (i32, i32) {
    %c0_i32 = arith.constant 0 : i32
    %c0_i32_0 = arith.constant 0 : i32
    %c0_i32_1 = arith.constant 0 : i32
    return %c0_i32, %c0_i32_0 : i32, i32
  }
  func.func @transform_6(%arg0: i32) -> (i32, i32) {
    %c0_i32 = arith.constant 0 : i32
    %c0_i32_0 = arith.constant 0 : i32
    return %arg0, %c0_i32 : i32, i32
  }
}

</mosaic_0001>

<llo_original>
// kernel: tpu_custom_call.1
$region0: #{tpu_custom_call.1}
  #allocation0 [shape = 'u32[]', space=smem, size = 0x4, offset = 0x4, fixed_abs, tag = 'smem constant byte address 0x4 - core index']
  #allocation1 [shape = 'u32[144,128]{1,0:T(1,128)}', space=vmem, size = 0x12000, scoped, tag = 'internal scratch']
  %s0 = inlined_call_operand.hbm [shape: f32[8,128], index: 0, kind: input, shape index: {}]
  %s1 = inlined_call_operand.hbm [shape: f32[8,128], index: 1, kind: output, shape index: {}]
  %s2 = sld [smem:[#allocation0]]
  $region41: #{tpu_custom_call.1} parent=0
    _
  %s4 = ssub.s32 1, %s2
  %s5 = scalar_select 0, %s4, %s2
  $region1: #{tpu_custom_call.1} parent=0
    #allocation2 [shape = 'u8[4096]{0}', space=vmem, size = 0x1000, scoped, tag = 'input window, operand 0, single buffered']
    #allocation3 [shape = 's32[2]{0}', space=sflag, size = 0x8, scoped, tag = 'scoped memory for tpu_custom_call.1']
    #allocation4 [shape = 's32[2]{0}', space=sflag, size = 0x8, scoped, tag = 'scoped memory for tpu_custom_call.1']
    #allocation5 [shape = 'u8[4096]{0}', space=vmem, size = 0x1000, scoped, tag = 'output window, operand 0, single buffered']
    %6 = vsyncpa [#allocation3], 0
    %7 = vsyncpa [#allocation4], 0
    loop: start=0, step=1, limit=4
    $region2: #{tpu_custom_call.1} parent=1 // loop_pre_header
      _
    $region3: #{tpu_custom_call.1} parent=1 // loop_header
      %s9 = sphi 0, %s13
      %p10 = scmp.ge.s32.totalorder %s9, 4
      %s17 = sphi 0, %s17
      %s19 = sphi 0, %s17
      %s20 = sphi 0, %s19
      %s34 = sphi 0, %s20
      %s38 = sphi 0, %s38
      %s40 = sphi 0, %s38
      %s41 = sphi 0, %s40
      %s55 = sphi 0, %s41
    $region4: #{tpu_custom_call.1} parent=1 // loop_header_branch
      %12 = sbr.rel (%p10) target = $region8
    $region5: #{tpu_custom_call.1} parent=1 // loop_body
      %s14 = ssub.s32 %s9, 1
      %s15 = ssub.s32 %s9, 2
      %s16 = sadd.s32 %s9, 1
      %s18 = sadd.s32 %s17, 1
      %p21 = scmp.eq.s32.totalorder %s9, 1
      %p22 = scmp.ne.s32.totalorder %s17, %s19
      %p23 = scmp.eq.s32.totalorder %s9, 0
      %p24 = por %p22, %p23
      %p25 = scmp.ne.s32.totalorder %s17, %s19
      %p26 = scmp.eq.s32.totalorder %s14, 1
      %p27 = por %p25, %p26
      %p28 = scmp.ne.s32.totalorder %s19, %s20
      %p29 = scmp.eq.s32.totalorder %s14, 0
      %p30 = por %p28, %p29
      %p31 = scmp.ne.s32.totalorder %s19, %s20
      %p32 = scmp.eq.s32.totalorder %s15, 1
      %p33 = por %p31, %p32
      %p35 = scmp.ne.s32.totalorder %s20, %s34
      %p36 = scmp.eq.s32.totalorder %s15, 0
      %p37 = por %p35, %p36
      %s39 = sadd.s32 %s38, 1
      %p42 = scmp.eq.s32.totalorder %s9, 1
      %p43 = scmp.ne.s32.totalorder %s38, %s40
      %p44 = scmp.eq.s32.totalorder %s9, 0
      %p45 = por %p43, %p44
      %p46 = scmp.ne.s32.totalorder %s38, %s40
      %p47 = scmp.eq.s32.totalorder %s14, 1
      %p48 = por %p46, %p47
      %p49 = scmp.ne.s32.totalorder %s40, %s41
      %p50 = scmp.eq.s32.totalorder %s14, 0
      %p51 = por %p49, %p50
      %p52 = scmp.ne.s32.totalorder %s40, %s41
      %p53 = scmp.eq.s32.totalorder %s15, 1
      %p54 = por %p52, %p53
      %p56 = scmp.ne.s32.totalorder %s41, %s55
      %p57 = scmp.eq.s32.totalorder %s15, 0
      %p58 = por %p56, %p57
      %p59 = scmp.le.s32.totalorder 1, %s9
      %p60 = scmp.lt.s32.totalorder %s9, 3
      %p61 = pnand %p59, %p60
      %p62 = pneg %p61
      // Predicated region
      $region9: #{tpu_custom_call.1} parent=5 // pred_check
        _
      $region10: #{tpu_custom_call.1} parent=5 // pred_check_branch
        %64 = sbr.rel (%p61) target = $region12
      $region11: #{tpu_custom_call.1} parent=5 // pred_region
        %s65 = ssub.s32 %s9, 1
        // Predicated region
        $region13: #{tpu_custom_call.1} parent=11 // pred_check
          %p66 = pneg %p30
        $region14: #{tpu_custom_call.1} parent=11 // pred_check_branch
          %68 = sbr.rel (%p66) target = $region16
        $region15: #{tpu_custom_call.1} parent=11 // pred_region
          %s70 = ssub.s32 128, 128
          %71 = vsyncadd [#allocation3], %s70
          %s73 = sshll.u32 [#allocation2], 4
          %s74 = int_to_ptr.vmem [resolvable:$true] %s73
          %76 = dma.hbm_to_vmem [thread:$0]  %s0, 128, %s74, [#allocation3]
        $region16: #{tpu_custom_call.1} parent=11 // pred_fallthru
          _
      $region12: #{tpu_custom_call.1} parent=5 // pred_fallthru
        _
      %p77 = scmp.lt.s32.totalorder %s9, 2
      // Predicated region
      $region17: #{tpu_custom_call.1} parent=5 // pred_check
        %p78 = pneg %p77
      $region18: #{tpu_custom_call.1} parent=5 // pred_check_branch
        %80 = sbr.rel (%p78) target = $region20
      $region19: #{tpu_custom_call.1} parent=5 // pred_region
        _
      $region20: #{tpu_custom_call.1} parent=5 // pred_fallthru
        _
      %p81 = scmp.le.s32.totalorder 1, %s9
      %p82 = scmp.lt.s32.totalorder %s9, 3
      %p83 = pnand %p81, %p82
      %p84 = pneg %p83
      // Predicated region
      $region21: #{tpu_custom_call.1} parent=5 // pred_check
        _
      $region22: #{tpu_custom_call.1} parent=5 // pred_check_branch
        %86 = sbr.rel (%p83) target = $region24
      $region23: #{tpu_custom_call.1} parent=5 // pred_region
        %s87 = ssub.s32 %s9, 1
        // Predicated region
        $region25: #{tpu_custom_call.1} parent=23 // pred_check
          %p88 = pneg %p30
        $region26: #{tpu_custom_call.1} parent=23 // pred_check_branch
          %90 = sbr.rel (%p88) target = $region28
        $region27: #{tpu_custom_call.1} parent=23 // pred_region
          %91 = dma.done [#allocation3], 128
        $region28: #{tpu_custom_call.1} parent=23 // pred_fallthru
          _
        %p92 = pneg %p30
        %p93 = pneg %p27
        %p94 = pneg %p51
        %p95 = pneg %p48
        %v96 = vld [vmem:[#allocation2] sm:$0xff]
        %v97 = vadd.f32 %v96, 1.0
        %98 = vst [vmem:[#allocation5] sm:$0xff] %v97
        // Predicated region
        $region29: #{tpu_custom_call.1} parent=23 // pred_check
          %p99 = pneg %p48
        $region30: #{tpu_custom_call.1} parent=23 // pred_check_branch
          %101 = sbr.rel (%p99) target = $region32
        $region31: #{tpu_custom_call.1} parent=23 // pred_region
          %s103 = ssub.s32 128, 128
          %104 = vsyncadd [#allocation4], %s103
          %s106 = sshll.u32 [#allocation5], 4
          %s107 = int_to_ptr.vmem [resolvable:$true] %s106
          %109 = dma.vmem_to_hbm [thread:$0]  %s107, 128, %s1, [#allocation4]
        $region32: #{tpu_custom_call.1} parent=23 // pred_fallthru
          _
        // Predicated region
        $region33: #{tpu_custom_call.1} parent=23 // pred_check
          %p110 = pneg %p48
        $region34: #{tpu_custom_call.1} parent=23 // pred_check_branch
          %112 = sbr.rel (%p110) target = $region36
        $region35: #{tpu_custom_call.1} parent=23 // pred_region
          %113 = dma.done [#allocation4], 128
        $region36: #{tpu_custom_call.1} parent=23 // pred_fallthru
          _
      $region24: #{tpu_custom_call.1} parent=5 // pred_fallthru
        _
      %p114 = scmp.le.s32.totalorder 2, %s9
      // Predicated region
      $region37: #{tpu_custom_call.1} parent=5 // pred_check
        %p115 = pneg %p114
      $region38: #{tpu_custom_call.1} parent=5 // pred_check_branch
        %117 = sbr.rel (%p115) target = $region40
      $region39: #{tpu_custom_call.1} parent=5 // pred_region
        %s118 = ssub.s32 %s9, 2
      $region40: #{tpu_custom_call.1} parent=5 // pred_fallthru
        _
    $region6: #{tpu_custom_call.1} parent=1 // loop_footer
      %s13 = sadd.s32 1, %s9
    $region7: #{tpu_custom_call.1} parent=1 // loop_footer_branch
      %8 = sbr.rel target = $region3
    $region8: #{tpu_custom_call.1} parent=1 // loop_exit
      _
    %119 = vsyncpa [#allocation3], 1
    %s120 = scalar_lea.sflag [#allocation3], 1
    %121 = vsyncpa %s120, 1
    %122 = vsyncpa [#allocation4], 1
    %s123 = scalar_lea.sflag [#allocation4], 1
    %124 = vsyncpa %s123, 1

// kernel: gaussian_policy_forward.1
$region0: #{gaussian_policy_forward.1}
  #allocation0 [shape = 'u32[]', space=smem, size = 0x4, offset = 0x4, fixed_abs, tag = 'smem constant byte address 0x4 - core index']
  #allocation1 [shape = 'u32[144,128]{1,0:T(1,128)}', space=vmem, size = 0x12000, scoped, tag = 'internal scratch']
  %s0 = inlined_call_operand.vmem [shape: f32[16,16], index: 0, kind: input, shape index: {}]
  %s1 = inlined_call_operand.vmem [shape: bf16[16,128], index: 1, kind: input, shape index: {}]
  %s2 = inlined_call_operand.hbm [shape: bf16[128,128], index: 2, kind: input, shape index: {}]
  %s3 = inlined_call_operand.hbm [shape: bf16[128,128], index: 3, kind: input, shape index: {}]
  %s4 = inlined_call_operand.hbm [shape: bf16[128,128], index: 4, kind: input, shape index: {}]
  %s5 = inlined_call_operand.vmem [shape: f32[8,128], index: 5, kind: input, shape index: {}]
  %s6 = inlined_call_operand.vmem [shape: f32[16,128], index: 6, kind: output, shape index: {}]
  %s7 = sld [smem:[#allocation0]]
  $region46: #{gaussian_policy_forward.1} parent=0
    _
  %s9 = ssub.s32 1, %s7
  %s10 = scalar_select 0, %s9, %s7
  $region1: #{gaussian_policy_forward.1} parent=0
    #allocation2 [shape = 'u8[32768]{0}', space=vmem, size = 0x8000, scoped, tag = 'input window, operand 2, single buffered']
    #allocation3 [shape = 's32[1]{0}', space=sflag, size = 0x4, scoped, tag = 'scoped memory for gaussian_policy_forward.1']
    #allocation4 [shape = 'u8[32768]{0}', space=vmem, size = 0x8000, scoped, tag = 'input window, operand 3, single buffered']
    #allocation5 [shape = 's32[1]{0}', space=sflag, size = 0x4, scoped, tag = 'scoped memory for gaussian_policy_forward.1']
    #allocation6 [shape = 'u8[32768]{0}', space=vmem, size = 0x8000, scoped, tag = 'input window, operand 4, single buffered']
    %11 = vsyncpa [#allocation3], 0
    %12 = vsyncpa [#allocation5], 0
    // Predicated region
    $region2: #{gaussian_policy_forward.1} parent=1 // pred_check
      _
    $region3: #{gaussian_policy_forward.1} parent=1 // pred_check_branch
      %14 = sbr.rel (0) target = $region5
    $region4: #{gaussian_policy_forward.1} parent=1 // pred_region
      _
    $region5: #{gaussian_policy_forward.1} parent=1 // pred_fallthru
      _
    // Predicated region
    $region6: #{gaussian_policy_forward.1} parent=1 // pred_check
      _
    $region7: #{gaussian_policy_forward.1} parent=1 // pred_check_branch
      %16 = sbr.rel (0) target = $region9
    $region8: #{gaussian_policy_forward.1} parent=1 // pred_region
      _
    $region9: #{gaussian_policy_forward.1} parent=1 // pred_fallthru
      _
    // Predicated region
    $region10: #{gaussian_policy_forward.1} parent=1 // pred_check
      _
    $region11: #{gaussian_policy_forward.1} parent=1 // pred_check_branch
      %18 = sbr.rel (0) target = $region13
    $region12: #{gaussian_policy_forward.1} parent=1 // pred_region
      %s20 = ssub.s32 1024, 1024
      %21 = vsyncadd [#allocation3], %s20
      %s22 = sshll.u32 [#allocation2], 4
      %s23 = int_to_ptr.vmem [resolvable:$true] %s22
      %28 = dma.hbm_to_vmem [thread:$0]  %s2, 1024, %s23, [#allocation3], 64, 64, 4
    $region13: #{gaussian_policy_forward.1} parent=1 // pred_fallthru
      _
    // Predicated region
    $region14: #{gaussian_policy_forward.1} parent=1 // pred_check
      _
    $region15: #{gaussian_policy_forward.1} parent=1 // pred_check_branch
      %30 = sbr.rel (0) target = $region17
    $region16: #{gaussian_policy_forward.1} parent=1 // pred_region
      %s32 = ssub.s32 1024, 1024
      %33 = vsyncadd [#allocation5], %s32
      %s34 = sshll.u32 [#allocation4], 4
      %s35 = int_to_ptr.vmem [resolvable:$true] %s34
      %40 = dma.hbm_to_vmem [thread:$0]  %s3, 1024, %s35, [#allocation5], 64, 64, 4
    $region17: #{gaussian_policy_forward.1} parent=1 // pred_fallthru
      _
    // Predicated region
    $region18: #{gaussian_policy_forward.1} parent=1 // pred_check
      _
    $region19: #{gaussian_policy_forward.1} parent=1 // pred_check_branch
      %42 = sbr.rel (0) target = $region21
    $region20: #{gaussian_policy_forward.1} parent=1 // pred_region
      %s44 = ssub.s32 1024, 1024
      %45 = vsyncadd [#allocation5], %s44
      %s46 = sshll.u32 [#allocation6], 4
      %s47 = int_to_ptr.vmem [resolvable:$true] %s46
      %52 = dma.hbm_to_vmem [thread:$0]  %s4, 1024, %s47, [#allocation5], 64, 64, 4
    $region21: #{gaussian_policy_forward.1} parent=1 // pred_fallthru
      _
    // Predicated region
    $region22: #{gaussian_policy_forward.1} parent=1 // pred_check
      _
    $region23: #{gaussian_policy_forward.1} parent=1 // pred_check_branch
      %54 = sbr.rel (0) target = $region25
    $region24: #{gaussian_policy_forward.1} parent=1 // pred_region
      _
    $region25: #{gaussian_policy_forward.1} parent=1 // pred_fallthru
      _
    // Predicated region
    $region26: #{gaussian_policy_forward.1} parent=1 // pred_check
      _
    $region27: #{gaussian_policy_forward.1} parent=1 // pred_check_branch
      %56 = sbr.rel (0) target = $region29
    $region28: #{gaussian_policy_forward.1} parent=1 // pred_region
      %57 = dma.done [#allocation3], 1024
    $region29: #{gaussian_policy_forward.1} parent=1 // pred_fallthru
      _
    // Predicated region
    $region30: #{gaussian_policy_forward.1} parent=1 // pred_check
      _
    $region31: #{gaussian_policy_forward.1} parent=1 // pred_check_branch
      %59 = sbr.rel (0) target = $region33
    $region32: #{gaussian_policy_forward.1} parent=1 // pred_region
      %60 = dma.done [#allocation5], 1024
    $region33: #{gaussian_policy_forward.1} parent=1 // pred_fallthru
      _
    // Predicated region
    $region34: #{gaussian_policy_forward.1} parent=1 // pred_check
      _
    $region35: #{gaussian_policy_forward.1} parent=1 // pred_check_branch
      %62 = sbr.rel (0) target = $region37
    $region36: #{gaussian_policy_forward.1} parent=1 // pred_region
      %63 = dma.done [#allocation5], 1024
    $region37: #{gaussian_policy_forward.1} parent=1 // pred_fallthru
      _
    %v65 = vld [vmem:[%s0] sm:$0xff]
    %v66 = vld [vmem:[%s0 + $0x8] sm:$0xff]
    %v67 = vpack.c.bf16 %v66, %v65
    %v68 = vld [vmem:[%s1] sm:$0xf]
    %v69 = vld [vmem:[%s1 + $0x4] sm:$0xf]
    %v70 = vld [vmem:[%s5] sm:$0x1]
    %v71 = vlaneseq
    %v72 = vshrl.u32 %v71, 7
    %v73 = vsub.s32 0, %v72
    %v74 = vrot.slane %v70, %v73
    %v77 = vunpack.c.l.b16 %v68
    %v78 = vunpack.c.l.b16 %v69
    %v79 = vpack.c.b16 %v78, %v77
    %vm81 = vcmask 130048
    %v83 = vsel %vm81, %v67, 0
    %85 = vmatprep.subr.bf16.mxu0 0
    %86 = vmatpush1.bf16.msra.mxu0 %v79
    %87 = vmatprep.subr.bf16.mxu0 0
    %88 = vmatpush1.bf16.msra.mxu0 0
    %89 = vmatprep.subr.bf16.mxu0 0
    %90 = vmatpush1.bf16.msra.mxu0 0
    %91 = vmatprep.subr.bf16.mxu0 0
    %92 = vmatpush1.bf16.msra.mxu0 0
    %93 = vmatprep.subr.bf16.mxu0 0
    %94 = vmatpush1.bf16.msra.mxu0 0
    %95 = vmatprep.subr.bf16.mxu0 0
    %96 = vmatpush1.bf16.msra.mxu0 0
    %97 = vmatprep.subr.bf16.mxu0 0
    %98 = vmatpush1.bf16.msra.mxu0 0
    %99 = vmatprep.subr.bf16.mxu0 0
    %100 = vmatpush1.bf16.msra.mxu0 0
    %101 = vmatprep.subr.bf16.mxu0 0
    %102 = vmatpush1.bf16.msra.mxu0 0
    %103 = vmatprep.subr.bf16.mxu0 0
    %104 = vmatpush1.bf16.msra.mxu0 0
    %105 = vmatprep.subr.bf16.mxu0 0
    %106 = vmatpush1.bf16.msra.mxu0 0
    %107 = vmatprep.subr.bf16.mxu0 0
    %108 = vmatpush1.bf16.msra.mxu0 0
    %109 = vmatprep.subr.bf16.mxu0 0
    %110 = vmatpush1.bf16.msra.mxu0 0
    %111 = vmatprep.subr.bf16.mxu0 0
    %112 = vmatpush1.bf16.msra.mxu0 0
    %113 = vmatprep.subr.bf16.mxu0 0
    %114 = vmatpush1.bf16.msra.mxu0 0
    %115 = vmatprep.subr.bf16.mxu0 0
    %116 = vmatpush1.bf16.msra.mxu0 0
    %117 = vmatprep.mubr.bf16.mxu0 0
    %118 = vmatmul.mubr.bf16.gmra.mrb[0].mxu0 %v83
    %v119 = vpop.f32.mrb[0].mxu0
    %v120 = vadd.f32 %v74, %v119
    %v121 = vpop.f32.mrb[0].mxu0
    %v122 = vpop.f32.mrb[0].mxu0
    %v123 = vadd.f32 %v74, %v122
    %v124 = vpop.f32.mrb[0].mxu0
    %125 = vdwg.mxu0
    %v126 = vmul.f32 %v120, 0.5
    %v127 = vmul.f32 %v123, 0.5
    %v128 = vmul.f32 %v120, 0.70710677
    %v129 = vmul.f32 %v123, 0.70710677
    %v130 = verf.f32.pop %v128
    %v131 = verf.f32.pop %v129
    %v132 = vadd.f32 %v130, 1.0
    %v133 = vadd.f32 %v131, 1.0
    %v134 = vmul.f32 %v126, %v132
    %v135 = vmul.f32 %v127, %v133
    %v136 = vpack.c.bf16 %v135, %v134
    %v137 = vld [vmem:[#allocation2] sm:$0xf]
    %v138 = vld [vmem:[#allocation2 + $0x4] sm:$0xf]
    %v139 = vld [vmem:[#allocation2 + $0x8] sm:$0xf]
    %v140 = vld [vmem:[#allocation2 + $0xc] sm:$0xf]
    %v141 = vld [vmem:[#allocation2 + $0x10] sm:$0xf]
    %v142 = vld [vmem:[#allocation2 + $0x14] sm:$0xf]
    %v143 = vld [vmem:[#allocation2 + $0x18] sm:$0xf]
    %v144 = vld [vmem:[#allocation2 + $0x1c] sm:$0xf]
    %v145 = vld [vmem:[#allocation2 + $0x20] sm:$0xf]
    %v146 = vld [vmem:[#allocation2 + $0x24] sm:$0xf]
    %v147 = vld [vmem:[#allocation2 + $0x28] sm:$0xf]
    %v148 = vld [vmem:[#allocation2 + $0x2c] sm:$0xf]
    %v149 = vld [vmem:[#allocation2 + $0x30] sm:$0xf]
    %v150 = vld [vmem:[#allocation2 + $0x34] sm:$0xf]
    %v151 = vld [vmem:[#allocation2 + $0x38] sm:$0xf]
    %v152 = vld [vmem:[#allocation2 + $0x3c] sm:$0xf]
    %v153 = vld [vmem:[%s5 + $0x1] sm:$0x1]
    %v154 = vlaneseq
    %v155 = vshrl.u32 %v154, 7
    %v156 = vsub.s32 0, %v155
    %v157 = vrot.slane %v153, %v156
    %v174 = vunpack.c.l.b16 %v137
    %v175 = vunpack.c.l.b16 %v138
    %v176 = vunpack.c.l.b16 %v139
    %v177 = vunpack.c.l.b16 %v140
    %v178 = vunpack.c.l.b16 %v141
    %v179 = vunpack.c.l.b16 %v142
    %v180 = vunpack.c.l.b16 %v143
    %v181 = vunpack.c.l.b16 %v144
    %v182 = vunpack.c.l.b16 %v145
    %v183 = vunpack.c.l.b16 %v146
    %v184 = vunpack.c.l.b16 %v147
    %v185 = vunpack.c.l.b16 %v148
    %v186 = vunpack.c.l.b16 %v149
    %v187 = vunpack.c.l.b16 %v150
    %v188 = vunpack.c.l.b16 %v151
    %v189 = vunpack.c.l.b16 %v152
    %v190 = vpack.c.b16 %v175, %v174
    %v191 = vpack.c.b16 %v177, %v176
    %v192 = vpack.c.b16 %v179, %v178
    %v193 = vpack.c.b16 %v181, %v180
    %v194 = vpack.c.b16 %v183, %v182
    %v195 = vpack.c.b16 %v185, %v184
    %v196 = vpack.c.b16 %v187, %v186
    %v197 = vpack.c.b16 %v189, %v188
    %206 = vmatprep.subr.bf16.mxu0 0
    %207 = vmatpush1.bf16.msra.mxu0 %v190
    %208 = vmatprep.subr.bf16.mxu0 0
    %209 = vmatpush1.bf16.msra.mxu0 %v191
    %210 = vmatprep.subr.bf16.mxu0 0
    %211 = vmatpush1.bf16.msra.mxu0 %v192
    %212 = vmatprep.subr.bf16.mxu0 0
    %213 = vmatpush1.bf16.msra.mxu0 %v193
    %214 = vmatprep.subr.bf16.mxu0 0
    %215 = vmatpush1.bf16.msra.mxu0 %v194
    %216 = vmatprep.subr.bf16.mxu0 0
    %217 = vmatpush1.bf16.msra.mxu0 %v195
    %218 = vmatprep.subr.bf16.mxu0 0
    %219 = vmatpush1.bf16.msra.mxu0 %v196
    %220 = vmatprep.subr.bf16.mxu0 0
    %221 = vmatpush1.bf16.msra.mxu0 %v197
    %222 = vmatprep.subr.bf16.mxu0 0
    %223 = vmatpush1.bf16.msra.mxu0 0
    %224 = vmatprep.subr.bf16.mxu0 0
    %225 = vmatpush1.bf16.msra.mxu0 0
    %226 = vmatprep.subr.bf16.mxu0 0
    %227 = vmatpush1.bf16.msra.mxu0 0
    %228 = vmatprep.subr.bf16.mxu0 0
    %229 = vmatpush1.bf16.msra.mxu0 0
    %230 = vmatprep.subr.bf16.mxu0 0
    %231 = vmatpush1.bf16.msra.mxu0 0
    %232 = vmatprep.subr.bf16.mxu0 0
    %233 = vmatpush1.bf16.msra.mxu0 0
    %234 = vmatprep.subr.bf16.mxu0 0
    %235 = vmatpush1.bf16.msra.mxu0 0
    %236 = vmatprep.subr.bf16.mxu0 0
    %237 = vmatpush1.bf16.msra.mxu0 0
    %238 = vmatprep.mubr.bf16.mxu0 0
    %239 = vmatmul.mubr.bf16.gmra.mrb[0].mxu0 %v136
    %v240 = vpop.f32.mrb[0].mxu0
    %v241 = vadd.f32 %v157, %v240
    %v242 = vpop.f32.mrb[0].mxu0
    %v243 = vpop.f32.mrb[0].mxu0
    %v244 = vadd.f32 %v157, %v243
    %v245 = vpop.f32.mrb[0].mxu0
    %246 = vdwg.mxu0
    %v247 = vmul.f32 %v241, 0.5
    %v248 = vmul.f32 %v244, 0.5
    %v249 = vmul.f32 %v241, 0.70710677
    %v250 = vmul.f32 %v244, 0.70710677
    %v251 = verf.f32.pop %v249
    %v252 = verf.f32.pop %v250
    %v253 = vadd.f32 %v251, 1.0
    %v254 = vadd.f32 %v252, 1.0
    %v255 = vmul.f32 %v247, %v253
    %v256 = vmul.f32 %v248, %v254
    %v257 = vpack.c.bf16 %v256, %v255
    %v258 = vld [vmem:[#allocation4] sm:$0xf]
    %v259 = vld [vmem:[#allocation4 + $0x4] sm:$0xf]
    %v260 = vld [vmem:[#allocation4 + $0x8] sm:$0xf]
    %v261 = vld [vmem:[#allocation4 + $0xc] sm:$0xf]
    %v262 = vld [vmem:[#allocation4 + $0x10] sm:$0xf]
    %v263 = vld [vmem:[#allocation4 + $0x14] sm:$0xf]
    %v264 = vld [vmem:[#allocation4 + $0x18] sm:$0xf]
    %v265 = vld [vmem:[#allocation4 + $0x1c] sm:$0xf]
    %v266 = vld [vmem:[#allocation4 + $0x20] sm:$0xf]
    %v267 = vld [vmem:[#allocation4 + $0x24] sm:$0xf]
    %v268 = vld [vmem:[#allocation4 + $0x28] sm:$0xf]
    %v269 = vld [vmem:[#allocation4 + $0x2c] sm:$0xf]
    %v270 = vld [vmem:[#allocation4 + $0x30] sm:$0xf]
    %v271 = vld [vmem:[#allocation4 + $0x34] sm:$0xf]
    %v272 = vld [vmem:[#allocation4 + $0x38] sm:$0xf]
    %v273 = vld [vmem:[#allocation4 + $0x3c] sm:$0xf]
    %v274 = vld [vmem:[%s5 + $0x2] sm:$0x1]
    %v275 = vlaneseq
    %v276 = vshrl.u32 %v275, 7
    %v277 = vsub.s32 0, %v276
    %v278 = vrot.slane %v274, %v277
    %v295 = vunpack.c.l.b16 %v258
    %v296 = vunpack.c.l.b16 %v259
    %v297 = vunpack.c.l.b16 %v260
    %v298 = vunpack.c.l.b16 %v261
    %v299 = vunpack.c.l.b16 %v262
    %v300 = vunpack.c.l.b16 %v263
    %v301 = vunpack.c.l.b16 %v264
    %v302 = vunpack.c.l.b16 %v265
    %v303 = vunpack.c.l.b16 %v266
    %v304 = vunpack.c.l.b16 %v267
    %v305 = vunpack.c.l.b16 %v268
    %v306 = vunpack.c.l.b16 %v269
    %v307 = vunpack.c.l.b16 %v270
    %v308 = vunpack.c.l.b16 %v271
    %v309 = vunpack.c.l.b16 %v272
    %v310 = vunpack.c.l.b16 %v273
    %v311 = vpack.c.b16 %v296, %v295
    %v312 = vpack.c.b16 %v298, %v297
    %v313 = vpack.c.b16 %v300, %v299
    %v314 = vpack.c.b16 %v302, %v301
    %v315 = vpack.c.b16 %v304, %v303
    %v316 = vpack.c.b16 %v306, %v305
    %v317 = vpack.c.b16 %v308, %v307
    %v318 = vpack.c.b16 %v310, %v309
    %327 = vmatprep.subr.bf16.mxu0 0
    %328 = vmatpush1.bf16.msra.mxu0 %v311
    %329 = vmatprep.subr.bf16.mxu0 0
    %330 = vmatpush1.bf16.msra.mxu0 %v312
    %331 = vmatprep.subr.bf16.mxu0 0
    %332 = vmatpush1.bf16.msra.mxu0 %v313
    %333 = vmatprep.subr.bf16.mxu0 0
    %334 = vmatpush1.bf16.msra.mxu0 %v314
    %335 = vmatprep.subr.bf16.mxu0 0
    %336 = vmatpush1.bf16.msra.mxu0 %v315
    %337 = vmatprep.subr.bf16.mxu0 0
    %338 = vmatpush1.bf16.msra.mxu0 %v316
    %339 = vmatprep.subr.bf16.mxu0 0
    %340 = vmatpush1.bf16.msra.mxu0 %v317
    %341 = vmatprep.subr.bf16.mxu0 0
    %342 = vmatpush1.bf16.msra.mxu0 %v318
    %343 = vmatprep.subr.bf16.mxu0 0
    %344 = vmatpush1.bf16.msra.mxu0 0
    %345 = vmatprep.subr.bf16.mxu0 0
    %346 = vmatpush1.bf16.msra.mxu0 0
    %347 = vmatprep.subr.bf16.mxu0 0
    %348 = vmatpush1.bf16.msra.mxu0 0
    %349 = vmatprep.subr.bf16.mxu0 0
    %350 = vmatpush1.bf16.msra.mxu0 0
    %351 = vmatprep.subr.bf16.mxu0 0
    %352 = vmatpush1.bf16.msra.mxu0 0
    %353 = vmatprep.subr.bf16.mxu0 0
    %354 = vmatpush1.bf16.msra.mxu0 0
    %355 = vmatprep.subr.bf16.mxu0 0
    %356 = vmatpush1.bf16.msra.mxu0 0
    %357 = vmatprep.subr.bf16.mxu0 0
    %358 = vmatpush1.bf16.msra.mxu0 0
    %359 = vmatprep.mubr.bf16.mxu0 0
    %360 = vmatmul.mubr.bf16.gmra.mrb[0].mxu0 %v257
    %v361 = vpop.f32.mrb[0].mxu0
    %v362 = vadd.f32 %v278, %v361
    %v363 = vpop.f32.mrb[0].mxu0
    %v364 = vpop.f32.mrb[0].mxu0
    %v365 = vadd.f32 %v278, %v364
    %v366 = vpop.f32.mrb[0].mxu0
    %367 = vdwg.mxu0
    %v368 = vmul.f32 %v362, 0.5
    %v369 = vmul.f32 %v365, 0.5
    %v370 = vmul.f32 %v362, 0.70710677
    %v371 = vmul.f32 %v365, 0.70710677
    %v372 = verf.f32.pop %v370
    %v373 = verf.f32.pop %v371
    %v374 = vadd.f32 %v372, 1.0
    %v375 = vadd.f32 %v373, 1.0
    %v376 = vmul.f32 %v368, %v374
    %v377 = vmul.f32 %v369, %v375
    %v378 = vpack.c.bf16 %v377, %v376
    %v379 = vld [vmem:[#allocation6] sm:$0xf]
    %v380 = vld [vmem:[#allocation6 + $0x4] sm:$0xf]
    %v381 = vld [vmem:[#allocation6 + $0x8] sm:$0xf]
    %v382 = vld [vmem:[#allocation6 + $0xc] sm:$0xf]
    %v383 = vld [vmem:[#allocation6 + $0x10] sm:$0xf]
    %v384 = vld [vmem:[#allocation6 + $0x14] sm:$0xf]
    %v385 = vld [vmem:[#allocation6 + $0x18] sm:$0xf]
    %v386 = vld [vmem:[#allocation6 + $0x1c] sm:$0xf]
    %v387 = vld [vmem:[#allocation6 + $0x20] sm:$0xf]
    %v388 = vld [vmem:[#allocation6 + $0x24] sm:$0xf]
    %v389 = vld [vmem:[#allocation6 + $0x28] sm:$0xf]
    %v390 = vld [vmem:[#allocation6 + $0x2c] sm:$0xf]
    %v391 = vld [vmem:[#allocation6 + $0x30] sm:$0xf]
    %v392 = vld [vmem:[#allocation6 + $0x34] sm:$0xf]
    %v393 = vld [vmem:[#allocation6 + $0x38] sm:$0xf]
    %v394 = vld [vmem:[#allocation6 + $0x3c] sm:$0xf]
    %v395 = vld [vmem:[%s5 + $0x3] sm:$0x1]
    %v396 = vlaneseq
    %v397 = vshrl.u32 %v396, 7
    %v398 = vsub.s32 0, %v397
    %v399 = vrot.slane %v395, %v398
    %v416 = vunpack.c.l.b16 %v379
    %v417 = vunpack.c.l.b16 %v380
    %v418 = vunpack.c.l.b16 %v381
    %v419 = vunpack.c.l.b16 %v382
    %v420 = vunpack.c.l.b16 %v383
    %v421 = vunpack.c.l.b16 %v384
    %v422 = vunpack.c.l.b16 %v385
    %v423 = vunpack.c.l.b16 %v386
    %v424 = vunpack.c.l.b16 %v387
    %v425 = vunpack.c.l.b16 %v388
    %v426 = vunpack.c.l.b16 %v389
    %v427 = vunpack.c.l.b16 %v390
    %v428 = vunpack.c.l.b16 %v391
    %v429 = vunpack.c.l.b16 %v392
    %v430 = vunpack.c.l.b16 %v393
    %v431 = vunpack.c.l.b16 %v394
    %v432 = vpack.c.b16 %v417, %v416
    %v433 = vpack.c.b16 %v419, %v418
    %v434 = vpack.c.b16 %v421, %v420
    %v435 = vpack.c.b16 %v423, %v422
    %v436 = vpack.c.b16 %v425, %v424
    %v437 = vpack.c.b16 %v427, %v426
    %v438 = vpack.c.b16 %v429, %v428
    %v439 = vpack.c.b16 %v431, %v430
    %448 = vmatprep.subr.bf16.mxu0 0
    %449 = vmatpush1.bf16.msra.mxu0 %v432
    %450 = vmatprep.subr.bf16.mxu0 0
    %451 = vmatpush1.bf16.msra.mxu0 %v433
    %452 = vmatprep.subr.bf16.mxu0 0
    %453 = vmatpush1.bf16.msra.mxu0 %v434
    %454 = vmatprep.subr.bf16.mxu0 0
    %455 = vmatpush1.bf16.msra.mxu0 %v435
    %456 = vmatprep.subr.bf16.mxu0 0
    %457 = vmatpush1.bf16.msra.mxu0 %v436
    %458 = vmatprep.subr.bf16.mxu0 0
    %459 = vmatpush1.bf16.msra.mxu0 %v437
    %460 = vmatprep.subr.bf16.mxu0 0
    %461 = vmatpush1.bf16.msra.mxu0 %v438
    %462 = vmatprep.subr.bf16.mxu0 0
    %463 = vmatpush1.bf16.msra.mxu0 %v439
    %464 = vmatprep.subr.bf16.mxu0 0
    %465 = vmatpush1.bf16.msra.mxu0 0
    %466 = vmatprep.subr.bf16.mxu0 0
    %467 = vmatpush1.bf16.msra.mxu0 0
    %468 = vmatprep.subr.bf16.mxu0 0
    %469 = vmatpush1.bf16.msra.mxu0 0
    %470 = vmatprep.subr.bf16.mxu0 0
    %471 = vmatpush1.bf16.msra.mxu0 0
    %472 = vmatprep.subr.bf16.mxu0 0
    %473 = vmatpush1.bf16.msra.mxu0 0
    %474 = vmatprep.subr.bf16.mxu0 0
    %475 = vmatpush1.bf16.msra.mxu0 0
    %476 = vmatprep.subr.bf16.mxu0 0
    %477 = vmatpush1.bf16.msra.mxu0 0
    %478 = vmatprep.subr.bf16.mxu0 0
    %479 = vmatpush1.bf16.msra.mxu0 0
    %480 = vmatprep.mubr.bf16.mxu0 0
    %481 = vmatmul.mubr.bf16.gmra.mrb[0].mxu0 %v378
    %v482 = vpop.f32.mrb[0].mxu0
    %v483 = vadd.f32 %v399, %v482
    %v484 = vpop.f32.mrb[0].mxu0
    %v485 = vpop.f32.mrb[0].mxu0
    %v486 = vadd.f32 %v399, %v485
    %v487 = vpop.f32.mrb[0].mxu0
    %488 = vdwg.mxu0
    %v489 = vlaneseq
    %v490 = vand.u32 %v489, 127
    %v491 = vmax.f32 %v483, -20.0
    %v492 = vmax.f32 %v486, -20.0
    %v493 = vmin.f32 %v491, 2.0
    %v494 = vmin.f32 %v492, 2.0
    %vm495 = vcmp.ge.s32.totalorder %v490, 64
    %v496 = vsel %vm495, %v493, %v483
    %v497 = vsel %vm495, %v494, %v486
    %498 = vst [vmem:[%s6] sm:$0xff] %v496
    %499 = vst [vmem:[%s6 + $0x8] sm:$0xff] %v497
    // Predicated region
    $region38: #{gaussian_policy_forward.1} parent=1 // pred_check
      _
    $region39: #{gaussian_policy_forward.1} parent=1 // pred_check_branch
      %501 = sbr.rel (0) target = $region41
    $region40: #{gaussian_policy_forward.1} parent=1 // pred_region
      _
    $region41: #{gaussian_policy_forward.1} parent=1 // pred_fallthru
      _
    // Predicated region
    $region42: #{gaussian_policy_forward.1} parent=1 // pred_check
      _
    $region43: #{gaussian_policy_forward.1} parent=1 // pred_check_branch
      %503 = sbr.rel (0) target = $region45
    $region44: #{gaussian_policy_forward.1} parent=1 // pred_region
      _
    $region45: #{gaussian_policy_forward.1} parent=1 // pred_fallthru
      _
    %504 = vsyncpa [#allocation3], 1
    %505 = vsyncpa [#allocation5], 1

</llo_original>
